<compile_context>
chip_gen: v7x
topology: tpu7x:2x2x1
jax: 0.10.0
libtpu: 0.0.40
codegen_flags: <defaults>
</compile_context>

<pallas_src>
import jax
import jax.numpy as jnp
from jax.experimental import pallas as pl
from jax.experimental.pallas import tpu as pltpu

L2_EPS = 1e-12   # module's self.eps (clamp_min on the L2 norm)
BN_EPS = 1e-5    # torch.nn.BatchNorm1d default eps


def _make_kernel(bias):
    """Kernel over one (M, tc, N) channel tile. Refs:
       idx (1, N) i32, gamma_table (tc, D), [beta_table (tc, D)], val (M, tc, N), out (M, tc, N)."""

    def kernel(*refs):
        if bias:
            idx_ref, g_ref, b_ref, val_ref, out_ref = refs
        else:
            idx_ref, g_ref, val_ref, out_ref = refs
            b_ref = None

        m, tc, n = val_ref.shape
        d = g_ref.shape[1]

        # --- Conditional-embedding gather as a one-hot matmul (MXU, otherwise idle).
        # gamma[c, n] = gamma_table[idx[n], c]
        idx = idx_ref[...]                                               # (1, N) int32
        one_hot = jnp.where(
            jax.lax.broadcasted_iota(jnp.int32, (d, n), 0) == idx,
            jnp.float32(1.0), jnp.float32(0.0))                          # (D, N)
        gamma = jnp.dot(g_ref[...].astype(jnp.float32), one_hot,
                        preferred_element_type=jnp.float32)              # (tc, N)

        # --- L2 norm over the representation axis, streamed per-M slice.
        sumsq = jnp.zeros((tc, n), jnp.float32)
        for mm in range(m):
            v = val_ref[mm].astype(jnp.float32)                          # (tc, N)
            sumsq = sumsq + v * v

        # clamp sumsq at eps^2  <=>  clamp ||v|| at eps; rsqrt runs on the EUP.
        clamped = jnp.maximum(sumsq, L2_EPS * L2_EPS)
        inv_norm = jax.lax.rsqrt(clamped)                                # 1 / max(||v||, eps)
        norm = clamped * inv_norm                                        # max(||v||, eps)

        # --- BatchNorm1d(affine=False), training-mode biased stats over nodes (lane axis).
        mean = jnp.mean(norm, axis=1, keepdims=True)                     # (tc, 1)
        centered = norm - mean
        var = jnp.mean(centered * centered, axis=1, keepdims=True)       # (tc, 1)
        coef = gamma * centered * jax.lax.rsqrt(var + BN_EPS) * inv_norm  # (tc, N)

        # --- Elementwise rescale (+ bias), streamed per-M slice.
        if bias:
            beta = jnp.dot(b_ref[...].astype(jnp.float32), one_hot,
                           preferred_element_type=jnp.float32)           # (tc, N)
            for mm in range(m):
                out_ref[mm] = (coef * val_ref[mm].astype(jnp.float32)
                               + beta).astype(out_ref.dtype)
        else:
            for mm in range(m):
                out_ref[mm] = (coef * val_ref[mm].astype(jnp.float32)
                               ).astype(out_ref.dtype)

    return kernel


def _choose_tc(m, c, n, itemsize):
    """Largest channel tile (multiple of 8, or the full C) fitting a ~24 MiB VMEM budget:
    double-buffered in+out (M, tc, N) blocks plus ~8 fp32 (tc, N) temporaries."""
    per_chan_bytes = n * (4 * m * itemsize + 8 * 4)
    budget = 24 * 1024 * 1024
    cap = max(8, int(budget // max(per_chan_bytes, 1)))
    if c <= cap:
        return c                      # whole channel dim (block == full dim: always legal)
    return max(8, (cap // 8) * 8)     # multiple of 8 (sublane constraint)


def _gcbn_call_mcn(val_mcn, g_table_cd, b_table_cd, idx_row, bias):
    """val_mcn: (M, C, N); g/b_table_cd: (C, D); idx_row: (1, N) int32."""
    m, c, n = val_mcn.shape
    d = g_table_cd.shape[1]
    tc = _choose_tc(m, c, n, val_mcn.dtype.itemsize)
    grid = (pl.cdiv(c, tc),)

    in_specs = [
        pl.BlockSpec((1, n), lambda j: (0, 0)),        # cond idxs (broadcast over grid)
        pl.BlockSpec((tc, d), lambda j: (j, 0)),       # gamma embedding table (C, D)
    ]
    inputs = [idx_row, g_table_cd]
    if bias:
        in_specs.append(pl.BlockSpec((tc, d), lambda j: (j, 0)))
        inputs.append(b_table_cd)
    in_specs.append(pl.BlockSpec((m, tc, n), lambda j: (0, j, 0)))
    inputs.append(val_mcn)

    return pl.pallas_call(
        _make_kernel(bias),
        out_shape=jax.ShapeDtypeStruct((m, c, n), val_mcn.dtype),
        grid=grid,
        in_specs=in_specs,
        out_specs=pl.BlockSpec((m, tc, n), lambda j: (0, j, 0)),
        compiler_params=pltpu.CompilerParams(
            dimension_semantics=("parallel",),
            vmem_limit_bytes=48 * 1024 * 1024,
        ),
    )(*inputs)


def gcond_batch_norm_se3_mcn(feat_dict_mcn, cond_idxs, gamma_tables, beta_tables=None,
                             bias=True):
    """Fast path: features in lane-dense (M, C, N) layout; returns the same layout.
    gamma_tables/beta_tables: dict of (cond_depth, C) embedding weights."""
    idx_row = cond_idxs.astype(jnp.int32).reshape(1, -1)
    outputs = {}
    for key, val in feat_dict_mcn.items():
        g_cd = jnp.transpose(gamma_tables[key])          # (C, D) -- tiny
        b_cd = jnp.transpose(beta_tables[key]) if bias else None
        outputs[key] = _gcbn_call_mcn(val, g_cd, b_cd, idx_row, bias)
    return outputs


def gcond_batch_norm_se3(feat_dict, cond_idxs, gamma_tables, beta_tables=None, bias=True):
    """Drop-in PyTorch-layout wrapper: feat_dict[key] is (N, C, M) and so is the output.
    Pays two HBM transposes per degree; producers should prefer the *_mcn entry point."""
    feat_mcn = {k: jnp.transpose(v, (2, 1, 0)) for k, v in feat_dict.items()}
    out_mcn = gcond_batch_norm_se3_mcn(feat_mcn, cond_idxs, gamma_tables, beta_tables, bias)
    return {k: jnp.transpose(v, (2, 1, 0)) for k, v in out_mcn.items()}


def _reference(feat_dict, cond_idxs, gamma_tables, beta_tables=None, bias=True):
    """Pure-JAX reference mirroring the PyTorch forward (PyTorch (N, C, M) layout)."""
    outs = {}
    for key, val in feat_dict.items():
        gamma = gamma_tables[key][cond_idxs]                             # (N, C)
        norm = jnp.sqrt(jnp.sum(val * val, axis=-1, keepdims=True))      # (N, C, 1)
        norm = jnp.maximum(norm, L2_EPS)
        n2 = norm[..., 0]
        mean = jnp.mean(n2, axis=0)
        var = jnp.mean((n2 - mean) ** 2, axis=0)
        scale = ((n2 - mean) / jnp.sqrt(var + BN_EPS))[..., None]
        out = gamma[:, :, None] * scale * (val / norm)
        if bias:
            out = out + beta_tables[key][cond_idxs][:, :, None]
        outs[key] = out
    return outs


if __name__ == "__main__":
    # Fiber: [(n_chns, degree)] -- degree 0 with 16 channels, degree 1 with 8.
    fiber_struct = [(16, 0), (8, 1)]
    cond_depth = 4
    n_nodes = 128

    root = jax.random.PRNGKey(0)
    k_feat, k_gamma, k_beta, k_idx = jax.random.split(root, 4)

    feat_ncm, feat_mcn, gamma_tables, beta_tables = {}, {}, {}, {}
    for i, (n_chns, degree) in enumerate(fiber_struct):
        key = str(degree)
        v = jax.random.normal(jax.random.fold_in(k_feat, i),
                              (n_nodes, n_chns, 2 * degree + 1), jnp.float32)
        feat_ncm[key] = v                                   # PyTorch layout (N, C, M)
        feat_mcn[key] = jnp.transpose(v, (2, 1, 0))          # producer-side (M, C, N) layout
        # Embedding 'g-<d>'.weight.data.uniform_() -> U(0, 1)
        gamma_tables[key] = jax.random.uniform(
            jax.random.fold_in(k_gamma, i), (cond_depth, n_chns), jnp.float32)
        # Embedding 'b-<d>' (learnable; use nonzero values to exercise the bias path)
        beta_tables[key] = 0.1 * jax.random.normal(
            jax.random.fold_in(k_beta, i), (cond_depth, n_chns), jnp.float32)

    cond_idxs = jax.random.randint(k_idx, (n_nodes,), 0, cond_depth)

    # Fast lane-dense path (no wrapper transposes).
    outs_mcn = gcond_batch_norm_se3_mcn(feat_mcn, cond_idxs, gamma_tables, beta_tables, bias=True)
    outs_mcn = jax.block_until_ready(outs_mcn)

    refs = _reference(feat_ncm, cond_idxs, gamma_tables, beta_tables, bias=True)
    for k in outs_mcn:
        got = jnp.transpose(outs_mcn[k], (2, 1, 0))
        assert got.shape == feat_ncm[k].shape
        assert jnp.allclose(got, refs[k], atol=1e-5, rtol=1e-5), f"mismatch (mcn) for degree {k}"

    # Drop-in PyTorch-layout wrapper.
    outs_ncm = gcond_batch_norm_se3(feat_ncm, cond_idxs, gamma_tables, beta_tables, bias=True)
    outs_ncm = jax.block_until_ready(outs_ncm)
    for k in outs_ncm:
        assert jnp.allclose(outs_ncm[k], refs[k], atol=1e-5, rtol=1e-5), \
            f"mismatch (ncm) for degree {k}"

    # bias=False path.
    outs_nb = gcond_batch_norm_se3_mcn(feat_mcn, cond_idxs, gamma_tables, None, bias=False)
    outs_nb = jax.block_until_ready(outs_nb)
    refs_nb = _reference(feat_ncm, cond_idxs, gamma_tables, None, bias=False)
    for k in outs_nb:
        got = jnp.transpose(outs_nb[k], (2, 1, 0))
        assert jnp.allclose(got, refs_nb[k], atol=1e-5, rtol=1e-5), \
            f"mismatch (nobias) for degree {k}"

    print("KERNEL_OK")
</pallas_src>

<mosaic_0001>
module attributes {stable_mosaic.version = 11 : i64} {
  func.func @kernel(%arg0: i32, %arg1: memref<1x128xi32, #tpu.memory_space<vmem>>, %arg2: memref<16x4xf32, #tpu.memory_space<vmem>>, %arg3: memref<16x4xf32, #tpu.memory_space<vmem>>, %arg4: memref<1x16x128xf32, #tpu.memory_space<vmem>>, %arg5: memref<1x16x128xf32, #tpu.memory_space<vmem>>) attributes {dimension_semantics = [#tpu.dimension_semantics<parallel>], iteration_bounds = array<i64: 1>, scalar_prefetch = 0 : i64, scratch_operands = 0 : i64, tpu.core_type = #tpu.core_type<tc>, window_params = [{pipeline_mode = #tpu.pipeline_mode<synchronous>, transform_indices = @transform_0, window_bounds = array<i64: 1, 128>}, {transform_indices = @transform_1, window_bounds = array<i64: 16, 4>}, {transform_indices = @transform_2, window_bounds = array<i64: 16, 4>}, {transform_indices = @transform_3, window_bounds = array<i64: 1, 16, 128>}, {transform_indices = @transform_4, window_bounds = array<i64: 1, 16, 128>}]} {
    %c0 = arith.constant 0 : index
    %c0_0 = arith.constant 0 : index
    %0 = vector.load %arg1[%c0, %c0_0] : memref<1x128xi32, #tpu.memory_space<vmem>>, vector<1x128xi32>
    %1 = tpu.iota {dimensions = array<i32: 0>} : vector<4x128xi32>
    %2 = vector.broadcast %0 : vector<1x128xi32> to vector<4x128xi32>
    %3 = arith.cmpi eq, %1, %2 : vector<4x128xi32>
    %cst = arith.constant 1.000000e+00 : f32
    %cst_1 = arith.constant 0.000000e+00 : f32
    %4 = vector.broadcast %cst : f32 to vector<4x128xf32>
    %5 = vector.broadcast %cst_1 : f32 to vector<4x128xf32>
    %6 = arith.select %3, %4, %5 : vector<4x128xi1>, vector<4x128xf32>
    %c0_2 = arith.constant 0 : index
    %c0_3 = arith.constant 0 : index
    %7 = vector.load %arg2[%c0_2, %c0_3] : memref<16x4xf32, #tpu.memory_space<vmem>>, vector<16x4xf32>
    %cst_4 = arith.constant dense<0.000000e+00> : vector<16x128xf32>
    %8 = tpu.matmul %7, %6, %cst_4 {dimension_numbers = #tpu.dot_dimension_numbers<[1], [0], [0], [1], [0, 0, 1, 1], [], []>} : vector<16x4xf32>, vector<4x128xf32>, vector<16x128xf32> -> vector<16x128xf32>
    %cst_5 = arith.constant 0.000000e+00 : f32
    %9 = vector.broadcast %cst_5 : f32 to vector<16x128xf32>
    %c0_6 = arith.constant 0 : index
    %c0_7 = arith.constant 0 : index
    %c0_8 = arith.constant 0 : index
    %10 = vector.load %arg4[%c0_6, %c0_7, %c0_8] : memref<1x16x128xf32, #tpu.memory_space<vmem>>, vector<1x16x128xf32>
    %11 = vector.shape_cast %10 : vector<1x16x128xf32> to vector<16x128xf32>
    %12 = arith.mulf %11, %11 : vector<16x128xf32>
    %13 = arith.addf %9, %12 : vector<16x128xf32>
    %cst_9 = arith.constant 1.000000e-24 : f32
    %14 = vector.broadcast %cst_9 : f32 to vector<16x128xf32>
    %15 = arith.maximumf %13, %14 : vector<16x128xf32>
    %16 = math.rsqrt %15 : vector<16x128xf32>
    %17 = arith.mulf %15, %16 : vector<16x128xf32>
    %cst_10 = arith.constant dense<0.000000e+00> : vector<16xf32>
    %18 = vector.multi_reduction <add>, %17, %cst_10 [1] : vector<16x128xf32> to vector<16xf32>
    %19 = vector.shape_cast %18 : vector<16xf32> to vector<16x1xf32>
    %cst_11 = arith.constant 1.280000e+02 : f32
    %20 = vector.broadcast %cst_11 : f32 to vector<16x1xf32>
    %21 = arith.divf %19, %20 : vector<16x1xf32>
    %22 = vector.broadcast %21 : vector<16x1xf32> to vector<16x128xf32>
    %23 = arith.subf %17, %22 : vector<16x128xf32>
    %24 = arith.mulf %23, %23 : vector<16x128xf32>
    %cst_12 = arith.constant dense<0.000000e+00> : vector<16xf32>
    %25 = vector.multi_reduction <add>, %24, %cst_12 [1] : vector<16x128xf32> to vector<16xf32>
    %26 = vector.shape_cast %25 : vector<16xf32> to vector<16x1xf32>
    %cst_13 = arith.constant 1.280000e+02 : f32
    %27 = vector.broadcast %cst_13 : f32 to vector<16x1xf32>
    %28 = arith.divf %26, %27 : vector<16x1xf32>
    %29 = arith.mulf %8, %23 : vector<16x128xf32>
    %cst_14 = arith.constant 9.99999974E-6 : f32
    %30 = vector.broadcast %cst_14 : f32 to vector<16x1xf32>
    %31 = arith.addf %28, %30 : vector<16x1xf32>
    %32 = math.rsqrt %31 : vector<16x1xf32>
    %33 = vector.broadcast %32 : vector<16x1xf32> to vector<16x128xf32>
    %34 = arith.mulf %29, %33 : vector<16x128xf32>
    %35 = arith.mulf %34, %16 : vector<16x128xf32>
    %c0_15 = arith.constant 0 : index
    %c0_16 = arith.constant 0 : index
    %36 = vector.load %arg3[%c0_15, %c0_16] : memref<16x4xf32, #tpu.memory_space<vmem>>, vector<16x4xf32>
    %cst_17 = arith.constant dense<0.000000e+00> : vector<16x128xf32>
    %37 = tpu.matmul %36, %6, %cst_17 {dimension_numbers = #tpu.dot_dimension_numbers<[1], [0], [0], [1], [0, 0, 1, 1], [], []>} : vector<16x4xf32>, vector<4x128xf32>, vector<16x128xf32> -> vector<16x128xf32>
    %c0_18 = arith.constant 0 : index
    %c0_19 = arith.constant 0 : index
    %c0_20 = arith.constant 0 : index
    %38 = vector.load %arg4[%c0_18, %c0_19, %c0_20] : memref<1x16x128xf32, #tpu.memory_space<vmem>>, vector<1x16x128xf32>
    %39 = vector.shape_cast %38 : vector<1x16x128xf32> to vector<16x128xf32>
    %40 = arith.mulf %35, %39 : vector<16x128xf32>
    %41 = arith.addf %40, %37 : vector<16x128xf32>
    %c0_21 = arith.constant 0 : index
    %c0_22 = arith.constant 0 : index
    %c0_23 = arith.constant 0 : index
    %42 = vector.load %arg5[%c0_21, %c0_22, %c0_23] : memref<1x16x128xf32, #tpu.memory_space<vmem>>, vector<1x16x128xf32>
    %43 = vector.shape_cast %42 : vector<1x16x128xf32> to vector<16x128xf32>
    %44 = vector.shape_cast %41 : vector<16x128xf32> to vector<1x16x128xf32>
    tpu.vector_store %arg5[%c0_21, %c0_22, %c0_23], %44 {strides = array<i32>} : memref<1x16x128xf32, #tpu.memory_space<vmem>>, vector<1x16x128xf32>,
    return
  }
  func.func @transform_0(%arg0: i32) -> (i32, i32) {
    %c0_i32 = arith.constant 0 : i32
    %c0_i32_0 = arith.constant 0 : i32
    %c0_i32_1 = arith.constant 0 : i32
    return %c0_i32, %c0_i32_0 : i32, i32
  }
  func.func @transform_1(%arg0: i32) -> (i32, i32) {
    %c0_i32 = arith.constant 0 : i32
    %c0_i32_0 = arith.constant 0 : i32
    return %arg0, %c0_i32 : i32, i32
  }
  func.func @transform_2(%arg0: i32) -> (i32, i32) {
    %c0_i32 = arith.constant 0 : i32
    %c0_i32_0 = arith.constant 0 : i32
    return %arg0, %c0_i32 : i32, i32
  }
  func.func @transform_3(%arg0: i32) -> (i32, i32, i32) {
    %c0_i32 = arith.constant 0 : i32
    %c0_i32_0 = arith.constant 0 : i32
    %c0_i32_1 = arith.constant 0 : i32
    return %c0_i32, %arg0, %c0_i32_0 : i32, i32, i32
  }
  func.func @transform_4(%arg0: i32) -> (i32, i32, i32) {
    %c0_i32 = arith.constant 0 : i32
    %c0_i32_0 = arith.constant 0 : i32
    %c0_i32_1 = arith.constant 0 : i32
    return %c0_i32, %arg0, %c0_i32_0 : i32, i32, i32
  }
}

</mosaic_0001>

<llo_original>
// kernel: tpu_custom_call.1
$region0: #{tpu_custom_call.1}
  #allocation0 [shape = 'u32[]', space=smem, size = 0x4, offset = 0x4, fixed_abs, tag = 'smem constant byte address 0x4 - core index']
  #allocation1 [shape = 'u32[144,128]{1,0:T(1,128)}', space=vmem, size = 0x12000, scoped, tag = 'internal scratch']
  %s0 = inlined_call_operand.vmem [shape: s32[1,128], index: 0, kind: input, shape index: {}]
  %s1 = inlined_call_operand.vmem [shape: f32[16,4], index: 1, kind: input, shape index: {}]
  %s2 = inlined_call_operand.vmem [shape: f32[16,4], index: 2, kind: input, shape index: {}]
  %s3 = inlined_call_operand.vmem [shape: f32[1,16,128], index: 3, kind: input, shape index: {}]
  %s4 = inlined_call_operand.hbm [shape: f32[1,16,128], index: 4, kind: output, shape index: {}]
  %s5 = sld [smem:[#allocation0]]
  $region26: #{tpu_custom_call.1} parent=0
    _
  %s7 = ssub.s32 1, %s5
  %s8 = scalar_select 0, %s7, %s5
  $region1: #{tpu_custom_call.1} parent=0
    #allocation2 [shape = 'u8[8192]{0}', space=vmem, size = 0x2000, scoped, tag = 'output window, operand 0, single buffered']
    #allocation3 [shape = 's32[1]{0}', space=sflag, size = 0x4, scoped, tag = 'scoped memory for tpu_custom_call.1']
    %9 = vsyncpa [#allocation3], 0
    // Predicated region
    $region2: #{tpu_custom_call.1} parent=1 // pred_check
      _
    $region3: #{tpu_custom_call.1} parent=1 // pred_check_branch
      %11 = sbr.rel (0) target = $region5
    $region4: #{tpu_custom_call.1} parent=1 // pred_region
      _
    $region5: #{tpu_custom_call.1} parent=1 // pred_fallthru
      _
    // Predicated region
    $region6: #{tpu_custom_call.1} parent=1 // pred_check
      _
    $region7: #{tpu_custom_call.1} parent=1 // pred_check_branch
      %13 = sbr.rel (0) target = $region9
    $region8: #{tpu_custom_call.1} parent=1 // pred_region
      _
    $region9: #{tpu_custom_call.1} parent=1 // pred_fallthru
      _
    // Predicated region
    $region10: #{tpu_custom_call.1} parent=1 // pred_check
      _
    $region11: #{tpu_custom_call.1} parent=1 // pred_check_branch
      %15 = sbr.rel (0) target = $region13
    $region12: #{tpu_custom_call.1} parent=1 // pred_region
      _
    $region13: #{tpu_custom_call.1} parent=1 // pred_fallthru
      _
    // Predicated region
    $region14: #{tpu_custom_call.1} parent=1 // pred_check
      _
    $region15: #{tpu_custom_call.1} parent=1 // pred_check_branch
      %17 = sbr.rel (0) target = $region17
    $region16: #{tpu_custom_call.1} parent=1 // pred_region
      _
    $region17: #{tpu_custom_call.1} parent=1 // pred_fallthru
      _
    %v18 = vld [vmem:[%s0] sm:$0x1]
    %v19 = vlaneseq
    %v20 = vshrl.u32 %v19, 7
    %v21 = vlaneseq
    %v22 = vshrl.u32 %v21, 7
    %v23 = vsub.s32 0, %v22
    %v24 = vrot.slane %v18, %v23
    %vm25 = vcmp.eq.s32.totalorder %v20, %v24
    %v26 = vsel %vm25, 1.0, 0.0
    %v27 = vld [vmem:[%s1] sm:$0xff]
    %v28 = vld [vmem:[%s1 + $0x8] sm:$0xff]
    %vm29 = vcmask 31744
    %v31 = vsel %vm29, %v27, 0
    %v34 = vsel %vm29, %v28, 0
    %vm36 = vcmask 1043456
    %v38 = vsel %vm36, %v26, 0
    %40 = vmatprep.subr.mxu0 0.0
    %41 = vmatpush1.msra.mxu0 %v38
    %42 = vmatprep.subr.mxu0 0.0
    %43 = vmatpush1.msra.mxu0 0.0
    %44 = vmatprep.subr.mxu0 0.0
    %45 = vmatpush1.msra.mxu0 0.0
    %46 = vmatprep.subr.mxu0 0.0
    %47 = vmatpush1.msra.mxu0 0.0
    %48 = vmatprep.subr.mxu0 0.0
    %49 = vmatpush1.msra.mxu0 0.0
    %50 = vmatprep.subr.mxu0 0.0
    %51 = vmatpush1.msra.mxu0 0.0
    %52 = vmatprep.subr.mxu0 0.0
    %53 = vmatpush1.msra.mxu0 0.0
    %54 = vmatprep.subr.mxu0 0.0
    %55 = vmatpush1.msra.mxu0 0.0
    %56 = vmatprep.subr.mxu0 0.0
    %57 = vmatpush1.msra.mxu0 0.0
    %58 = vmatprep.subr.mxu0 0.0
    %59 = vmatpush1.msra.mxu0 0.0
    %60 = vmatprep.subr.mxu0 0.0
    %61 = vmatpush1.msra.mxu0 0.0
    %62 = vmatprep.subr.mxu0 0.0
    %63 = vmatpush1.msra.mxu0 0.0
    %64 = vmatprep.subr.mxu0 0.0
    %65 = vmatpush1.msra.mxu0 0.0
    %66 = vmatprep.subr.mxu0 0.0
    %67 = vmatpush1.msra.mxu0 0.0
    %68 = vmatprep.subr.mxu0 0.0
    %69 = vmatpush1.msra.mxu0 0.0
    %70 = vmatprep.subr.mxu0 0.0
    %71 = vmatpush1.msra.mxu0 0.0
    %72 = vmatprep.subr.mxu0 0.0
    %73 = vmatpush1.msra.mxu0 0.0
    %74 = vmatprep.subr.mxu0 0.0
    %75 = vmatpush1.msra.mxu0 0.0
    %76 = vmatprep.subr.mxu0 0.0
    %77 = vmatpush1.msra.mxu0 0.0
    %78 = vmatprep.subr.mxu0 0.0
    %79 = vmatpush1.msra.mxu0 0.0
    %80 = vmatprep.subr.mxu0 0.0
    %81 = vmatpush1.msra.mxu0 0.0
    %82 = vmatprep.subr.mxu0 0.0
    %83 = vmatpush1.msra.mxu0 0.0
    %84 = vmatprep.subr.mxu0 0.0
    %85 = vmatpush1.msra.mxu0 0.0
    %86 = vmatprep.subr.mxu0 0.0
    %87 = vmatpush1.msra.mxu0 0.0
    %88 = vmatprep.subr.mxu0 0.0
    %89 = vmatpush1.msra.mxu0 0.0
    %90 = vmatprep.subr.mxu0 0.0
    %91 = vmatpush1.msra.mxu0 0.0
    %92 = vmatprep.subr.mxu0 0.0
    %93 = vmatpush1.msra.mxu0 0.0
    %94 = vmatprep.subr.mxu0 0.0
    %95 = vmatpush1.msra.mxu0 0.0
    %96 = vmatprep.subr.mxu0 0.0
    %97 = vmatpush1.msra.mxu0 0.0
    %98 = vmatprep.subr.mxu0 0.0
    %99 = vmatpush1.msra.mxu0 0.0
    %100 = vmatprep.subr.mxu0 0.0
    %101 = vmatpush1.msra.mxu0 0.0
    %102 = vmatprep.subr.mxu0 0.0
    %103 = vmatpush1.msra.mxu0 0.0
    %104 = vmatprep.mubr.f32.mxu0 0.0
    %105 = vmatmul.mubr.f32.gmra.mrb[0].mxu0 %v31
    %v106 = vpop.f32.mrb[0].mxu0
    %v107 = vadd.f32 0.0, %v106
    %v108 = vpop.f32.mrb[0].mxu0
    %109 = vmatprep.mubr.f32.mxu0 0.0
    %110 = vmatmul.mubr.f32.gmra.mrb[0].mxu0 %v34
    %v111 = vpop.f32.mrb[0].mxu0
    %v112 = vadd.f32 0.0, %v111
    %v113 = vpop.f32.mrb[0].mxu0
    %114 = vdwg.mxu0
    %v115 = vld [vmem:[%s3] sm:$0xff]
    %v116 = vld [vmem:[%s3 + $0x8] sm:$0xff]
    %v117 = vmul.f32 %v115, %v115
    %v118 = vmul.f32 %v116, %v116
    %v119 = vadd.f32 %v117, 0.0
    %v120 = vadd.f32 %v118, 0.0
    %v121 = vmax.f32 %v119, 1e-24
    %v122 = vmax.f32 %v120, 1e-24
    %v123 = vrsqrt.pop %v121
    %v124 = vrsqrt.pop %v122
    %v125 = vmul.f32 %v121, %v123
    %v126 = vmul.f32 %v122, %v124
    %127 = vadd.xlane.f32.xlu0 %v125
    %v128 = vpop.xlane.xlu0 %127
    %129 = vadd.xlane.f32.xlu0 %v126
    %v130 = vpop.xlane.xlu0 %129
    %v131 = vrcp.pop 128.0
    %v132 = vmul.f32 %v128, %v131
    %v133 = vmul.f32 %v130, %v131
    %v134 = vsub.f32 %v125, %v132
    %v135 = vsub.f32 %v126, %v133
    %v136 = vmul.f32 %v134, %v134
    %v137 = vmul.f32 %v135, %v135
    %138 = vadd.xlane.f32.xlu0 %v136
    %v139 = vpop.xlane.xlu0 %138
    %140 = vadd.xlane.f32.xlu0 %v137
    %v141 = vpop.xlane.xlu0 %140
    %v142 = vmul.f32 %v139, %v131
    %v143 = vmul.f32 %v141, %v131
    %v144 = vmul.f32 %v107, %v134
    %v145 = vmul.f32 %v112, %v135
    %v146 = vadd.f32 %v142, 1e-05
    %v147 = vadd.f32 %v143, 1e-05
    %v148 = vrsqrt.pop %v146
    %v149 = vrsqrt.pop %v147
    %v150 = vmul.f32 %v144, %v148
    %v151 = vmul.f32 %v145, %v149
    %v152 = vmul.f32 %v150, %v123
    %v153 = vmul.f32 %v151, %v124
    %v154 = vld [vmem:[%s2] sm:$0xff]
    %v155 = vld [vmem:[%s2 + $0x8] sm:$0xff]
    %v157 = vsel %vm29, %v154, 0
    %v160 = vsel %vm29, %v155, 0
    %162 = vmatprep.subr.mxu0 0.0
    %163 = vmatpush1.msra.mxu0 %v38
    %164 = vmatprep.subr.mxu0 0.0
    %165 = vmatpush1.msra.mxu0 0.0
    %166 = vmatprep.subr.mxu0 0.0
    %167 = vmatpush1.msra.mxu0 0.0
    %168 = vmatprep.subr.mxu0 0.0
    %169 = vmatpush1.msra.mxu0 0.0
    %170 = vmatprep.subr.mxu0 0.0
    %171 = vmatpush1.msra.mxu0 0.0
    %172 = vmatprep.subr.mxu0 0.0
    %173 = vmatpush1.msra.mxu0 0.0
    %174 = vmatprep.subr.mxu0 0.0
    %175 = vmatpush1.msra.mxu0 0.0
    %176 = vmatprep.subr.mxu0 0.0
    %177 = vmatpush1.msra.mxu0 0.0
    %178 = vmatprep.subr.mxu0 0.0
    %179 = vmatpush1.msra.mxu0 0.0
    %180 = vmatprep.subr.mxu0 0.0
    %181 = vmatpush1.msra.mxu0 0.0
    %182 = vmatprep.subr.mxu0 0.0
    %183 = vmatpush1.msra.mxu0 0.0
    %184 = vmatprep.subr.mxu0 0.0
    %185 = vmatpush1.msra.mxu0 0.0
    %186 = vmatprep.subr.mxu0 0.0
    %187 = vmatpush1.msra.mxu0 0.0
    %188 = vmatprep.subr.mxu0 0.0
    %189 = vmatpush1.msra.mxu0 0.0
    %190 = vmatprep.subr.mxu0 0.0
    %191 = vmatpush1.msra.mxu0 0.0
    %192 = vmatprep.subr.mxu0 0.0
    %193 = vmatpush1.msra.mxu0 0.0
    %194 = vmatprep.subr.mxu0 0.0
    %195 = vmatpush1.msra.mxu0 0.0
    %196 = vmatprep.subr.mxu0 0.0
    %197 = vmatpush1.msra.mxu0 0.0
    %198 = vmatprep.subr.mxu0 0.0
    %199 = vmatpush1.msra.mxu0 0.0
    %200 = vmatprep.subr.mxu0 0.0
    %201 = vmatpush1.msra.mxu0 0.0
    %202 = vmatprep.subr.mxu0 0.0
    %203 = vmatpush1.msra.mxu0 0.0
    %204 = vmatprep.subr.mxu0 0.0
    %205 = vmatpush1.msra.mxu0 0.0
    %206 = vmatprep.subr.mxu0 0.0
    %207 = vmatpush1.msra.mxu0 0.0
    %208 = vmatprep.subr.mxu0 0.0
    %209 = vmatpush1.msra.mxu0 0.0
    %210 = vmatprep.subr.mxu0 0.0
    %211 = vmatpush1.msra.mxu0 0.0
    %212 = vmatprep.subr.mxu0 0.0
    %213 = vmatpush1.msra.mxu0 0.0
    %214 = vmatprep.subr.mxu0 0.0
    %215 = vmatpush1.msra.mxu0 0.0
    %216 = vmatprep.subr.mxu0 0.0
    %217 = vmatpush1.msra.mxu0 0.0
    %218 = vmatprep.subr.mxu0 0.0
    %219 = vmatpush1.msra.mxu0 0.0
    %220 = vmatprep.subr.mxu0 0.0
    %221 = vmatpush1.msra.mxu0 0.0
    %222 = vmatprep.subr.mxu0 0.0
    %223 = vmatpush1.msra.mxu0 0.0
    %224 = vmatprep.subr.mxu0 0.0
    %225 = vmatpush1.msra.mxu0 0.0
    %226 = vmatprep.mubr.f32.mxu0 0.0
    %227 = vmatmul.mubr.f32.gmra.mrb[0].mxu0 %v157
    %v228 = vpop.f32.mrb[0].mxu0
    %v229 = vadd.f32 0.0, %v228
    %v230 = vpop.f32.mrb[0].mxu0
    %231 = vmatprep.mubr.f32.mxu0 0.0
    %232 = vmatmul.mubr.f32.gmra.mrb[0].mxu0 %v160
    %v233 = vpop.f32.mrb[0].mxu0
    %v234 = vadd.f32 0.0, %v233
    %v235 = vpop.f32.mrb[0].mxu0
    %236 = vdwg.mxu0
    %v237 = vmul.f32 %v152, %v115
    %v238 = vmul.f32 %v153, %v116
    %v239 = vadd.f32 %v237, %v229
    %v240 = vadd.f32 %v238, %v234
    %241 = vst [vmem:[#allocation2] sm:$0xff] %v239
    %242 = vst [vmem:[#allocation2 + $0x8] sm:$0xff] %v240
    // Predicated region
    $region18: #{tpu_custom_call.1} parent=1 // pred_check
      _
    $region19: #{tpu_custom_call.1} parent=1 // pred_check_branch
      %244 = sbr.rel (0) target = $region21
    $region20: #{tpu_custom_call.1} parent=1 // pred_region
      %s246 = ssub.s32 256, 256
      %247 = vsyncadd [#allocation3], %s246
      %s248 = sshll.u32 [#allocation2], 4
      %s249 = int_to_ptr.vmem [resolvable:$true] %s248
      %254 = dma.vmem_to_hbm [thread:$0]  %s249, 256, %s4, [#allocation3], 128, 128, 8
    $region21: #{tpu_custom_call.1} parent=1 // pred_fallthru
      _
    // Predicated region
    $region22: #{tpu_custom_call.1} parent=1 // pred_check
      _
    $region23: #{tpu_custom_call.1} parent=1 // pred_check_branch
      %256 = sbr.rel (0) target = $region25
    $region24: #{tpu_custom_call.1} parent=1 // pred_region
      %257 = dma.done [#allocation3], 256
    $region25: #{tpu_custom_call.1} parent=1 // pred_fallthru
      _
    %258 = vsyncpa [#allocation3], 1

</llo_original>
